<compile_context>
chip_gen: v6e
topology: v6e:2x2x1
jax: 0.10.0
libtpu: 0.0.40
codegen_flags: <defaults>
</compile_context>

<pallas_src>
import functools

import jax
import jax.numpy as jnp
from jax.experimental import pallas as pl
from jax.experimental.pallas import tpu as pltpu


def _round_up(n, m):
    return (n + m - 1) // m * m


def _bf16_valu_ok():
    """bf16 elementwise only pays off on chips with bf16-capable VALUs (v6e+)."""
    try:
        kind = jax.devices()[0].device_kind.lower()
    except Exception:
        return True
    return not any(v in kind for v in ("v2", "v3", "v4", "v5"))


def _system_kernel(
    x_ref,
    gw1t_ref, gb1_ref, gw2t_ref, gb2_ref, gw3t_ref, gb3_ref,
    dw1t_ref, db1_ref, dw2t_ref, db2_ref, dw3t_ref, db3_ref,
    dw4t_ref, db4_ref,
    out_ref,
    *, bf16_elementwise,
):
    bf16 = jnp.bfloat16
    f32 = jnp.float32

    x = x_ref[...]                                       # (2, T) f32, feature-major

    # ---- Generator (all intermediates (features, T): batch lane-dense) ----
    # Layer 1 (2 -> 16): K=2 -> keep it on the VPU (two FMAs), skip the MXU.
    w = gw1t_ref[...]                                    # (16, 2) f32
    h = w[:, 0:1] * x[0:1, :] + w[:, 1:2] * x[1:2, :] + gb1_ref[...]
    h = jnp.maximum(h, 0.0)                              # (16, T) f32

    # Layer 2 (16 -> 32): bf16 MXU matmul, f32 accumulate.
    h = jnp.dot(gw2t_ref[...], h.astype(bf16),
                preferred_element_type=f32) + gb2_ref[...]
    h = jnp.maximum(h, 0.0)                              # (32, T) f32

    # Layer 3 (32 -> 2)
    h = jnp.dot(gw3t_ref[...], h.astype(bf16),
                preferred_element_type=f32) + gb3_ref[...]
    g = jnp.maximum(h, 0.0).astype(bf16)                 # (2, T) generator output

    # ---- Discriminator ----
    # TODO(synk): nn.Dropout(0.3) is identity in eval mode; training-mode dropout
    # masks are not reproduced here.

    def bias_relu(acc_f32, b_ref):
        # Bias + ReLU: bf16 on chips with bf16 VALUs (halves elementwise vreg-ops
        # and vst traffic on the wide layers), f32 otherwise. Either way the result
        # is the bf16 operand of the next MXU matmul.
        if bf16_elementwise:
            return jnp.maximum(acc_f32.astype(bf16) + b_ref[...].astype(bf16), 0.0)
        return jnp.maximum(acc_f32 + b_ref[...], 0.0).astype(bf16)

    # Layer 1 (2 -> 256): on the MXU. K=2 wastes MXU passes, but the MXU slot is
    # mostly idle while the VALU slot was the saturating one -> net win.
    h = bias_relu(
        jnp.dot(dw1t_ref[...], g, preferred_element_type=f32), db1_ref)   # (256, T)

    # Layer 2 (256 -> 128)
    h = bias_relu(
        jnp.dot(dw2t_ref[...], h, preferred_element_type=f32), db2_ref)   # (128, T)

    # Layer 3 (128 -> 64)
    h = bias_relu(
        jnp.dot(dw3t_ref[...], h, preferred_element_type=f32), db3_ref)   # (64, T)

    # Layer 4 (64 -> 1): feature-major makes the logits fall out directly as a
    # lane-dense (1, T) row -- no transpose of the (64, T) activation needed.
    logits = jnp.dot(dw4t_ref[...], h, preferred_element_type=f32) + db4_ref[...]

    # Numerically-stable sigmoid: exp(-|x|) never overflows; reciprocal -> EUP slot.
    e = jnp.exp(-jnp.abs(logits))
    num = jnp.where(logits >= 0.0, 1.0, e)
    sig = num * pl.reciprocal(1.0 + e, approx=True)
    out_ref[...] = sig.astype(out_ref.dtype)


def prepare_params(params):
    """One-time weight prep (hoisted out of the per-call path): transpose to
    [out, in] for the feature-major W^T @ h form and cast MXU operands to bf16."""
    bf16 = jnp.bfloat16
    f32 = jnp.float32

    def wt(name, dtype):
        return jnp.asarray(params[name]).T.astype(dtype)            # (out, in)

    def b(name):
        return jnp.asarray(params[name]).reshape(-1, 1).astype(f32)  # (out, 1)

    return (
        wt("gw1", f32), b("gb1"),      # (16, 2)   K=2 VPU layer stays f32
        wt("gw2", bf16), b("gb2"),     # (32, 16)
        wt("gw3", bf16), b("gb3"),     # (2, 32)
        wt("dw1", bf16), b("db1"),     # (256, 2)  K=2 but now on the MXU
        wt("dw2", bf16), b("db2"),     # (128, 256)
        wt("dw3", bf16), b("db3"),     # (64, 128)
        wt("dw4", bf16), b("db4"),     # (1, 64)
    )


def system_forward(x, prepared, *, tile_n=None, bf16_elementwise=None):
    """x: (N, 2) float32. prepared: output of prepare_params. Returns (N, 1) f32."""
    N, F = x.shape
    assert F == 2
    if bf16_elementwise is None:
        bf16_elementwise = _bf16_valu_ok()

    if tile_n is None:
        n8 = _round_up(N, 8)
        if n8 <= 128:
            tile_n = n8                         # tiny batch: single grid step
        else:
            # >=2 grid steps so a megacore (v7x) can shard the "parallel" batch
            # axis across its two TensorCores; cap at 1024 lanes to bound VMEM.
            tile_n = min(_round_up(pl.cdiv(n8, 2), 128), 1024)
    assert tile_n % 8 == 0
    N_pad = _round_up(N, tile_n)
    # Lane axis of every window must be a multiple of 128 or span the whole array.
    assert tile_n % 128 == 0 or tile_n == N_pad

    # Feature-major input: (2, N_pad) with the batch on lanes.
    x_fm = jnp.pad(x, ((0, N_pad - N), (0, 0))).T

    def full_spec(a):
        return pl.BlockSpec(a.shape, lambda i: (0, 0))

    in_specs = [pl.BlockSpec((2, tile_n), lambda i: (0, i))]
    in_specs += [full_spec(a) for a in prepared]
    out_spec = pl.BlockSpec((1, tile_n), lambda i: (0, i))

    kernel = functools.partial(_system_kernel, bf16_elementwise=bf16_elementwise)

    out_row = pl.pallas_call(
        kernel,
        out_shape=jax.ShapeDtypeStruct((1, N_pad), jnp.float32),
        grid_spec=pltpu.PrefetchScalarGridSpec(
            num_scalar_prefetch=0,
            grid=(N_pad // tile_n,),
            in_specs=in_specs,
            out_specs=out_spec,
        ),
        compiler_params=pltpu.CompilerParams(
            dimension_semantics=("parallel",),
            vmem_limit_bytes=8 * 1024 * 1024,
        ),
    )(x_fm, *prepared)

    return out_row[0, :N].reshape(N, 1)


def system_reference(x, params):
    """Pure-JAX f32 reference matching the PyTorch module (eval mode)."""
    h = jnp.maximum(x @ params["gw1"] + params["gb1"], 0.0)
    h = jnp.maximum(h @ params["gw2"] + params["gb2"], 0.0)
    g = jnp.maximum(h @ params["gw3"] + params["gb3"], 0.0)
    h = jnp.maximum(g @ params["dw1"] + params["db1"], 0.0)
    h = jnp.maximum(h @ params["dw2"] + params["db2"], 0.0)
    h = jnp.maximum(h @ params["dw3"] + params["db3"], 0.0)
    logits = h @ params["dw4"] + params["db4"]
    return jax.nn.sigmoid(logits)


def init_params(key):
    """Deterministic init matching PyTorch nn.Linear shapes (stored as [in, out])."""
    dims_g = [(2, 16), (16, 32), (32, 2)]
    dims_d = [(2, 256), (256, 128), (128, 64), (64, 1)]
    params = {}
    names = [("gw", "gb")] * 3 + [("dw", "db")] * 4
    dims = dims_g + dims_d
    idx_g, idx_d = 0, 0
    keys = jax.random.split(key, 2 * len(dims))
    for li, ((fan_in, fan_out), (wn, bn)) in enumerate(zip(dims, names)):
        if wn == "gw":
            idx_g += 1
            suffix = str(idx_g)
        else:
            idx_d += 1
            suffix = str(idx_d)
        bound = 1.0 / (fan_in ** 0.5)
        kw, kb = keys[2 * li], keys[2 * li + 1]
        params[wn + suffix] = jax.random.uniform(
            kw, (fan_in, fan_out), jnp.float32, -bound, bound)
        # biases as (1, out); prepare_params reshapes them to (out, 1)
        params[bn + suffix] = jax.random.uniform(
            kb, (1, fan_out), jnp.float32, -bound, bound)
    return params


if __name__ == "__main__":
    key = jax.random.PRNGKey(0)
    pkey, xkey = jax.random.split(key)
    params = init_params(pkey)
    prepared = prepare_params(params)   # one-time weight prep (hoisted)

    # Small batch of 2-D points, matching the module's Linear(2, ...) input.
    N = 8
    x = jax.random.normal(xkey, (N, 2), jnp.float32)

    out = system_forward(x, prepared)
    out = jax.block_until_ready(out)

    # Sanity: sigmoid output in [0, 1], shape (N, 1), finite, close to f32 ref.
    assert out.shape == (N, 1)
    assert bool(jnp.all(jnp.isfinite(out)))
    assert bool(jnp.all((out >= 0.0) & (out <= 1.0)))
    ref = system_reference(x, params)
    assert bool(jnp.all(jnp.abs(out - ref) < 5e-2)), (
        "kernel deviates from f32 reference beyond bf16 tolerance")
    print("KERNEL_OK")
</pallas_src>

<mosaic_0001>
module attributes {stable_mosaic.version = 11 : i64} {
  func.func @_system_kernel(%arg0: i32, %arg1: memref<2x8xf32, #tpu.memory_space<vmem>>, %arg2: memref<16x2xf32, #tpu.memory_space<vmem>>, %arg3: memref<16x1xf32, #tpu.memory_space<vmem>>, %arg4: memref<32x16xbf16, #tpu.memory_space<vmem>>, %arg5: memref<32x1xf32, #tpu.memory_space<vmem>>, %arg6: memref<2x32xbf16, #tpu.memory_space<vmem>>, %arg7: memref<2x1xf32, #tpu.memory_space<vmem>>, %arg8: memref<256x2xbf16, #tpu.memory_space<vmem>>, %arg9: memref<256x1xf32, #tpu.memory_space<vmem>>, %arg10: memref<128x256xbf16, #tpu.memory_space<vmem>>, %arg11: memref<128x1xf32, #tpu.memory_space<vmem>>, %arg12: memref<64x128xbf16, #tpu.memory_space<vmem>>, %arg13: memref<64x1xf32, #tpu.memory_space<vmem>>, %arg14: memref<1x64xbf16, #tpu.memory_space<vmem>>, %arg15: memref<1x1xf32, #tpu.memory_space<vmem>>, %arg16: memref<1x8xf32, #tpu.memory_space<vmem>>) attributes {dimension_semantics = [#tpu.dimension_semantics<parallel>], iteration_bounds = array<i64: 1>, scalar_prefetch = 0 : i64, scratch_operands = 0 : i64, tpu.core_type = #tpu.core_type<tc>, window_params = [{transform_indices = @transform_0, window_bounds = array<i64: 2, 8>}, {pipeline_mode = #tpu.pipeline_mode<synchronous>, transform_indices = @transform_1, window_bounds = array<i64: 16, 2>}, {pipeline_mode = #tpu.pipeline_mode<synchronous>, transform_indices = @transform_2, window_bounds = array<i64: 16, 1>}, {pipeline_mode = #tpu.pipeline_mode<synchronous>, transform_indices = @transform_3, window_bounds = array<i64: 32, 16>}, {pipeline_mode = #tpu.pipeline_mode<synchronous>, transform_indices = @transform_4, window_bounds = array<i64: 32, 1>}, {pipeline_mode = #tpu.pipeline_mode<synchronous>, transform_indices = @transform_5, window_bounds = array<i64: 2, 32>}, {pipeline_mode = #tpu.pipeline_mode<synchronous>, transform_indices = @transform_6, window_bounds = array<i64: 2, 1>}, {pipeline_mode = #tpu.pipeline_mode<synchronous>, transform_indices = @transform_7, window_bounds = array<i64: 256, 2>}, {pipeline_mode = #tpu.pipeline_mode<synchronous>, transform_indices = @transform_8, window_bounds = array<i64: 256, 1>}, {pipeline_mode = #tpu.pipeline_mode<synchronous>, transform_indices = @transform_9, window_bounds = array<i64: 128, 256>}, {pipeline_mode = #tpu.pipeline_mode<synchronous>, transform_indices = @transform_10, window_bounds = array<i64: 128, 1>}, {pipeline_mode = #tpu.pipeline_mode<synchronous>, transform_indices = @transform_11, window_bounds = array<i64: 64, 128>}, {pipeline_mode = #tpu.pipeline_mode<synchronous>, transform_indices = @transform_12, window_bounds = array<i64: 64, 1>}, {pipeline_mode = #tpu.pipeline_mode<synchronous>, transform_indices = @transform_13, window_bounds = array<i64: 1, 64>}, {pipeline_mode = #tpu.pipeline_mode<synchronous>, transform_indices = @transform_14, window_bounds = array<i64: 1, 1>}, {transform_indices = @transform_15, window_bounds = array<i64: 1, 8>}]} {
    %c0 = arith.constant 0 : index
    %c0_0 = arith.constant 0 : index
    %0 = vector.load %arg1[%c0, %c0_0] : memref<2x8xf32, #tpu.memory_space<vmem>>, vector<2x8xf32>
    %c0_1 = arith.constant 0 : index
    %c0_2 = arith.constant 0 : index
    %1 = vector.load %arg2[%c0_1, %c0_2] : memref<16x2xf32, #tpu.memory_space<vmem>>, vector<16x2xf32>
    %2 = vector.extract_strided_slice %1 {offsets = [0, 0], sizes = [16, 1], strides = [1, 1]} : vector<16x2xf32> to vector<16x1xf32>
    %3 = vector.extract_strided_slice %0 {offsets = [0, 0], sizes = [1, 8], strides = [1, 1]} : vector<2x8xf32> to vector<1x8xf32>
    %4 = vector.broadcast %2 : vector<16x1xf32> to vector<16x8xf32>
    %5 = vector.broadcast %3 : vector<1x8xf32> to vector<16x8xf32>
    %6 = arith.mulf %4, %5 : vector<16x8xf32>
    %7 = vector.extract_strided_slice %1 {offsets = [0, 1], sizes = [16, 1], strides = [1, 1]} : vector<16x2xf32> to vector<16x1xf32>
    %8 = vector.extract_strided_slice %0 {offsets = [1, 0], sizes = [1, 8], strides = [1, 1]} : vector<2x8xf32> to vector<1x8xf32>
    %9 = vector.broadcast %7 : vector<16x1xf32> to vector<16x8xf32>
    %10 = vector.broadcast %8 : vector<1x8xf32> to vector<16x8xf32>
    %11 = arith.mulf %9, %10 : vector<16x8xf32>
    %12 = arith.addf %6, %11 : vector<16x8xf32>
    %c0_3 = arith.constant 0 : index
    %c0_4 = arith.constant 0 : index
    %13 = vector.load %arg3[%c0_3, %c0_4] : memref<16x1xf32, #tpu.memory_space<vmem>>, vector<16x1xf32>
    %14 = vector.broadcast %13 : vector<16x1xf32> to vector<16x8xf32>
    %15 = arith.addf %12, %14 : vector<16x8xf32>
    %cst = arith.constant 0.000000e+00 : f32
    %16 = vector.broadcast %cst : f32 to vector<16x8xf32>
    %17 = arith.maximumf %15, %16 : vector<16x8xf32>
    %c0_5 = arith.constant 0 : index
    %c0_6 = arith.constant 0 : index
    %18 = vector.load %arg4[%c0_5, %c0_6] : memref<32x16xbf16, #tpu.memory_space<vmem>>, vector<32x16xbf16>
    %19 = arith.truncf %17 : vector<16x8xf32> to vector<16x8xbf16>
    %cst_7 = arith.constant dense<0.000000e+00> : vector<32x8xf32>
    %20 = tpu.matmul %18, %19, %cst_7 {dimension_numbers = #tpu.dot_dimension_numbers<[1], [0], [0], [1], [0, 0, 1, 1], [], []>} : vector<32x16xbf16>, vector<16x8xbf16>, vector<32x8xf32> -> vector<32x8xf32>
    %c0_8 = arith.constant 0 : index
    %c0_9 = arith.constant 0 : index
    %21 = vector.load %arg5[%c0_8, %c0_9] : memref<32x1xf32, #tpu.memory_space<vmem>>, vector<32x1xf32>
    %22 = vector.broadcast %21 : vector<32x1xf32> to vector<32x8xf32>
    %23 = arith.addf %20, %22 : vector<32x8xf32>
    %cst_10 = arith.constant 0.000000e+00 : f32
    %24 = vector.broadcast %cst_10 : f32 to vector<32x8xf32>
    %25 = arith.maximumf %23, %24 : vector<32x8xf32>
    %c0_11 = arith.constant 0 : index
    %c0_12 = arith.constant 0 : index
    %26 = vector.load %arg6[%c0_11, %c0_12] : memref<2x32xbf16, #tpu.memory_space<vmem>>, vector<2x32xbf16>
    %27 = arith.truncf %25 : vector<32x8xf32> to vector<32x8xbf16>
    %cst_13 = arith.constant dense<0.000000e+00> : vector<2x8xf32>
    %28 = tpu.matmul %26, %27, %cst_13 {dimension_numbers = #tpu.dot_dimension_numbers<[1], [0], [0], [1], [0, 0, 1, 1], [], []>} : vector<2x32xbf16>, vector<32x8xbf16>, vector<2x8xf32> -> vector<2x8xf32>
    %c0_14 = arith.constant 0 : index
    %c0_15 = arith.constant 0 : index
    %29 = vector.load %arg7[%c0_14, %c0_15] : memref<2x1xf32, #tpu.memory_space<vmem>>, vector<2x1xf32>
    %30 = vector.broadcast %29 : vector<2x1xf32> to vector<2x8xf32>
    %31 = arith.addf %28, %30 : vector<2x8xf32>
    %cst_16 = arith.constant 0.000000e+00 : f32
    %32 = vector.broadcast %cst_16 : f32 to vector<2x8xf32>
    %33 = arith.maximumf %31, %32 : vector<2x8xf32>
    %34 = arith.truncf %33 : vector<2x8xf32> to vector<2x8xbf16>
    %c0_17 = arith.constant 0 : index
    %c0_18 = arith.constant 0 : index
    %35 = vector.load %arg8[%c0_17, %c0_18] : memref<256x2xbf16, #tpu.memory_space<vmem>>, vector<256x2xbf16>
    %cst_19 = arith.constant dense<0.000000e+00> : vector<256x8xf32>
    %36 = tpu.matmul %35, %34, %cst_19 {dimension_numbers = #tpu.dot_dimension_numbers<[1], [0], [0], [1], [0, 0, 1, 1], [], []>} : vector<256x2xbf16>, vector<2x8xbf16>, vector<256x8xf32> -> vector<256x8xf32>
    %37 = arith.truncf %36 : vector<256x8xf32> to vector<256x8xbf16>
    %c0_20 = arith.constant 0 : index
    %c0_21 = arith.constant 0 : index
    %38 = vector.load %arg9[%c0_20, %c0_21] : memref<256x1xf32, #tpu.memory_space<vmem>>, vector<256x1xf32>
    %39 = arith.truncf %38 : vector<256x1xf32> to vector<256x1xbf16>
    %40 = vector.broadcast %39 : vector<256x1xbf16> to vector<256x8xbf16>
    %41 = arith.addf %37, %40 : vector<256x8xbf16>
    %cst_22 = arith.constant 0.000000e+00 : bf16
    %42 = vector.broadcast %cst_22 : bf16 to vector<256x8xbf16>
    %43 = arith.maximumf %41, %42 : vector<256x8xbf16>
    %c0_23 = arith.constant 0 : index
    %c0_24 = arith.constant 0 : index
    %44 = vector.load %arg10[%c0_23, %c0_24] : memref<128x256xbf16, #tpu.memory_space<vmem>>, vector<128x256xbf16>
    %cst_25 = arith.constant dense<0.000000e+00> : vector<128x8xf32>
    %45 = tpu.matmul %44, %43, %cst_25 {dimension_numbers = #tpu.dot_dimension_numbers<[1], [0], [0], [1], [0, 0, 1, 1], [], []>} : vector<128x256xbf16>, vector<256x8xbf16>, vector<128x8xf32> -> vector<128x8xf32>
    %46 = arith.truncf %45 : vector<128x8xf32> to vector<128x8xbf16>
    %c0_26 = arith.constant 0 : index
    %c0_27 = arith.constant 0 : index
    %47 = vector.load %arg11[%c0_26, %c0_27] : memref<128x1xf32, #tpu.memory_space<vmem>>, vector<128x1xf32>
    %48 = arith.truncf %47 : vector<128x1xf32> to vector<128x1xbf16>
    %49 = vector.broadcast %48 : vector<128x1xbf16> to vector<128x8xbf16>
    %50 = arith.addf %46, %49 : vector<128x8xbf16>
    %cst_28 = arith.constant 0.000000e+00 : bf16
    %51 = vector.broadcast %cst_28 : bf16 to vector<128x8xbf16>
    %52 = arith.maximumf %50, %51 : vector<128x8xbf16>
    %c0_29 = arith.constant 0 : index
    %c0_30 = arith.constant 0 : index
    %53 = vector.load %arg12[%c0_29, %c0_30] : memref<64x128xbf16, #tpu.memory_space<vmem>>, vector<64x128xbf16>
    %cst_31 = arith.constant dense<0.000000e+00> : vector<64x8xf32>
    %54 = tpu.matmul %53, %52, %cst_31 {dimension_numbers = #tpu.dot_dimension_numbers<[1], [0], [0], [1], [0, 0, 1, 1], [], []>} : vector<64x128xbf16>, vector<128x8xbf16>, vector<64x8xf32> -> vector<64x8xf32>
    %55 = arith.truncf %54 : vector<64x8xf32> to vector<64x8xbf16>
    %c0_32 = arith.constant 0 : index
    %c0_33 = arith.constant 0 : index
    %56 = vector.load %arg13[%c0_32, %c0_33] : memref<64x1xf32, #tpu.memory_space<vmem>>, vector<64x1xf32>
    %57 = arith.truncf %56 : vector<64x1xf32> to vector<64x1xbf16>
    %58 = vector.broadcast %57 : vector<64x1xbf16> to vector<64x8xbf16>
    %59 = arith.addf %55, %58 : vector<64x8xbf16>
    %cst_34 = arith.constant 0.000000e+00 : bf16
    %60 = vector.broadcast %cst_34 : bf16 to vector<64x8xbf16>
    %61 = arith.maximumf %59, %60 : vector<64x8xbf16>
    %c0_35 = arith.constant 0 : index
    %c0_36 = arith.constant 0 : index
    %62 = vector.load %arg14[%c0_35, %c0_36] : memref<1x64xbf16, #tpu.memory_space<vmem>>, vector<1x64xbf16>
    %cst_37 = arith.constant dense<0.000000e+00> : vector<1x8xf32>
    %63 = tpu.matmul %62, %61, %cst_37 {dimension_numbers = #tpu.dot_dimension_numbers<[1], [0], [0], [1], [0, 0, 1, 1], [], []>} : vector<1x64xbf16>, vector<64x8xbf16>, vector<1x8xf32> -> vector<1x8xf32>
    %c0_38 = arith.constant 0 : index
    %c0_39 = arith.constant 0 : index
    %64 = vector.load %arg15[%c0_38, %c0_39] : memref<1x1xf32, #tpu.memory_space<vmem>>, vector<1x1xf32>
    %65 = vector.broadcast %64 : vector<1x1xf32> to vector<1x8xf32>
    %66 = arith.addf %63, %65 : vector<1x8xf32>
    %67 = math.absf %66 : vector<1x8xf32>
    %cst_40 = arith.constant 0.000000e+00 : f32
    %68 = vector.broadcast %cst_40 : f32 to vector<1x8xf32>
    %69 = arith.subf %68, %67 : vector<1x8xf32>
    %70 = math.exp %69 : vector<1x8xf32>
    %cst_41 = arith.constant 0.000000e+00 : f32
    %71 = vector.broadcast %cst_41 : f32 to vector<1x8xf32>
    %72 = arith.cmpf oge, %66, %71 : vector<1x8xf32>
    %cst_42 = arith.constant 1.000000e+00 : f32
    %73 = vector.broadcast %cst_42 : f32 to vector<1x8xf32>
    %74 = arith.select %72, %73, %70 : vector<1x8xi1>, vector<1x8xf32>
    %cst_43 = arith.constant 1.000000e+00 : f32
    %75 = vector.broadcast %cst_43 : f32 to vector<1x8xf32>
    %76 = arith.addf %75, %70 : vector<1x8xf32>
    %77 = tpu.reciprocal %76 {approx = true} : vector<1x8xf32> -> vector<1x8xf32>
    %78 = arith.mulf %74, %77 : vector<1x8xf32>
    %c0_44 = arith.constant 0 : index
    %c0_45 = arith.constant 0 : index
    %79 = vector.load %arg16[%c0_44, %c0_45] : memref<1x8xf32, #tpu.memory_space<vmem>>, vector<1x8xf32>
    tpu.vector_store %arg16[%c0_44, %c0_45], %78 {strides = array<i32>} : memref<1x8xf32, #tpu.memory_space<vmem>>, vector<1x8xf32>,
    return
  }
  func.func @transform_0(%arg0: i32) -> (i32, i32) {
    %c0_i32 = arith.constant 0 : i32
    %c0_i32_0 = arith.constant 0 : i32
    return %c0_i32, %arg0 : i32, i32
  }
  func.func @transform_1(%arg0: i32) -> (i32, i32) {
    %c0_i32 = arith.constant 0 : i32
    %c0_i32_0 = arith.constant 0 : i32
    %c0_i32_1 = arith.constant 0 : i32
    return %c0_i32, %c0_i32_0 : i32, i32
  }
  func.func @transform_2(%arg0: i32) -> (i32, i32) {
    %c0_i32 = arith.constant 0 : i32
    %c0_i32_0 = arith.constant 0 : i32
    %c0_i32_1 = arith.constant 0 : i32
    return %c0_i32, %c0_i32_0 : i32, i32
  }
  func.func @transform_3(%arg0: i32) -> (i32, i32) {
    %c0_i32 = arith.constant 0 : i32
    %c0_i32_0 = arith.constant 0 : i32
    %c0_i32_1 = arith.constant 0 : i32
    return %c0_i32, %c0_i32_0 : i32, i32
  }
  func.func @transform_4(%arg0: i32) -> (i32, i32) {
    %c0_i32 = arith.constant 0 : i32
    %c0_i32_0 = arith.constant 0 : i32
    %c0_i32_1 = arith.constant 0 : i32
    return %c0_i32, %c0_i32_0 : i32, i32
  }
  func.func @transform_5(%arg0: i32) -> (i32, i32) {
    %c0_i32 = arith.constant 0 : i32
    %c0_i32_0 = arith.constant 0 : i32
    %c0_i32_1 = arith.constant 0 : i32
    return %c0_i32, %c0_i32_0 : i32, i32
  }
  func.func @transform_6(%arg0: i32) -> (i32, i32) {
    %c0_i32 = arith.constant 0 : i32
    %c0_i32_0 = arith.constant 0 : i32
    %c0_i32_1 = arith.constant 0 : i32
    return %c0_i32, %c0_i32_0 : i32, i32
  }
  func.func @transform_7(%arg0: i32) -> (i32, i32) {
    %c0_i32 = arith.constant 0 : i32
    %c0_i32_0 = arith.constant 0 : i32
    %c0_i32_1 = arith.constant 0 : i32
    return %c0_i32, %c0_i32_0 : i32, i32
  }
  func.func @transform_8(%arg0: i32) -> (i32, i32) {
    %c0_i32 = arith.constant 0 : i32
    %c0_i32_0 = arith.constant 0 : i32
    %c0_i32_1 = arith.constant 0 : i32
    return %c0_i32, %c0_i32_0 : i32, i32
  }
  func.func @transform_9(%arg0: i32) -> (i32, i32) {
    %c0_i32 = arith.constant 0 : i32
    %c0_i32_0 = arith.constant 0 : i32
    %c0_i32_1 = arith.constant 0 : i32
    return %c0_i32, %c0_i32_0 : i32, i32
  }
  func.func @transform_10(%arg0: i32) -> (i32, i32) {
    %c0_i32 = arith.constant 0 : i32
    %c0_i32_0 = arith.constant 0 : i32
    %c0_i32_1 = arith.constant 0 : i32
    return %c0_i32, %c0_i32_0 : i32, i32
  }
  func.func @transform_11(%arg0: i32) -> (i32, i32) {
    %c0_i32 = arith.constant 0 : i32
    %c0_i32_0 = arith.constant 0 : i32
    %c0_i32_1 = arith.constant 0 : i32
    return %c0_i32, %c0_i32_0 : i32, i32
  }
  func.func @transform_12(%arg0: i32) -> (i32, i32) {
    %c0_i32 = arith.constant 0 : i32
    %c0_i32_0 = arith.constant 0 : i32
    %c0_i32_1 = arith.constant 0 : i32
    return %c0_i32, %c0_i32_0 : i32, i32
  }
  func.func @transform_13(%arg0: i32) -> (i32, i32) {
    %c0_i32 = arith.constant 0 : i32
    %c0_i32_0 = arith.constant 0 : i32
    %c0_i32_1 = arith.constant 0 : i32
    return %c0_i32, %c0_i32_0 : i32, i32
  }
  func.func @transform_14(%arg0: i32) -> (i32, i32) {
    %c0_i32 = arith.constant 0 : i32
    %c0_i32_0 = arith.constant 0 : i32
    %c0_i32_1 = arith.constant 0 : i32
    return %c0_i32, %c0_i32_0 : i32, i32
  }
  func.func @transform_15(%arg0: i32) -> (i32, i32) {
    %c0_i32 = arith.constant 0 : i32
    %c0_i32_0 = arith.constant 0 : i32
    return %c0_i32, %arg0 : i32, i32
  }
}

</mosaic_0001>

<llo_original>
// kernel: tpu_custom_call.1
$region0: #{tpu_custom_call.1}
  #allocation0 [shape = 'u32[]', space=smem, size = 0x4, offset = 0x4, fixed_abs, tag = 'smem constant byte address 0x4 - core index']
  #allocation1 [shape = 'u32[144,128]{1,0:T(1,128)}', space=vmem, size = 0x12000, scoped, tag = 'internal scratch']
  #allocation2 [shape = 'f32[1,1]{1,0:T(1,128)S(1)}', space=vmem, size = 0x200, scoped, tag = 'scoped memory for tpu_custom_call.1']
  %s0 = inlined_call_operand.vmem [shape: f32[2,8], index: 0, kind: input, shape index: {}]
  %s1 = inlined_call_operand.vmem [shape: f32[16,2], index: 1, kind: input, shape index: {}]
  %s2 = inlined_call_operand.vmem [shape: f32[16,1], index: 2, kind: input, shape index: {}]
  %s3 = inlined_call_operand.vmem [shape: bf16[32,16], index: 3, kind: input, shape index: {}]
  %s4 = inlined_call_operand.vmem [shape: f32[32,1], index: 4, kind: input, shape index: {}]
  %s5 = inlined_call_operand.vmem [shape: bf16[2,32], index: 5, kind: input, shape index: {}]
  %s6 = inlined_call_operand.vmem [shape: f32[2,1], index: 6, kind: input, shape index: {}]
  %s7 = inlined_call_operand.vmem [shape: bf16[256,2], index: 7, kind: input, shape index: {}]
  %s8 = inlined_call_operand.vmem [shape: f32[256,1], index: 8, kind: input, shape index: {}]
  %s9 = inlined_call_operand.vmem [shape: bf16[128,256], index: 9, kind: input, shape index: {}]
  %s10 = inlined_call_operand.vmem [shape: f32[128,1], index: 10, kind: input, shape index: {}]
  %s11 = inlined_call_operand.vmem [shape: bf16[64,128], index: 11, kind: input, shape index: {}]
  %s12 = inlined_call_operand.vmem [shape: f32[64,1], index: 12, kind: input, shape index: {}]
  %s13 = inlined_call_operand.vmem [shape: bf16[1,64], index: 13, kind: input, shape index: {}]
  %s14 = inlined_call_operand.<no memory space> [shape: f32[1,1], index: 14, kind: input, shape index: {}]
  %s15 = inlined_call_operand.hbm [shape: f32[1,8], index: 15, kind: output, shape index: {}]
  %s16 = sld [smem:[#allocation0]]
  $region70: #{tpu_custom_call.1} parent=0
    _
  %s18 = ssub.s32 1, %s16
  %s19 = scalar_select 0, %s18, %s16
  %v20 = vstv %s14
  %21 = vst [vmem:[#allocation2] sm:$0x1] %v20
  $region1: #{tpu_custom_call.1} parent=0
    #allocation3 [shape = 'u8[512]{0}', space=vmem, size = 0x400, scoped, tag = 'output window, operand 0, single buffered']
    #allocation4 [shape = 's32[1]{0}', space=sflag, size = 0x4, scoped, tag = 'scoped memory for tpu_custom_call.1']
    %22 = vsyncpa [#allocation4], 0
    // Predicated region
    $region2: #{tpu_custom_call.1} parent=1 // pred_check
      _
    $region3: #{tpu_custom_call.1} parent=1 // pred_check_branch
      %24 = sbr.rel (0) target = $region5
    $region4: #{tpu_custom_call.1} parent=1 // pred_region
      _
    $region5: #{tpu_custom_call.1} parent=1 // pred_fallthru
      _
    // Predicated region
    $region6: #{tpu_custom_call.1} parent=1 // pred_check
      _
    $region7: #{tpu_custom_call.1} parent=1 // pred_check_branch
      %26 = sbr.rel (0) target = $region9
    $region8: #{tpu_custom_call.1} parent=1 // pred_region
      _
    $region9: #{tpu_custom_call.1} parent=1 // pred_fallthru
      _
    // Predicated region
    $region10: #{tpu_custom_call.1} parent=1 // pred_check
      _
    $region11: #{tpu_custom_call.1} parent=1 // pred_check_branch
      %28 = sbr.rel (0) target = $region13
    $region12: #{tpu_custom_call.1} parent=1 // pred_region
      _
    $region13: #{tpu_custom_call.1} parent=1 // pred_fallthru
      _
    // Predicated region
    $region14: #{tpu_custom_call.1} parent=1 // pred_check
      _
    $region15: #{tpu_custom_call.1} parent=1 // pred_check_branch
      %30 = sbr.rel (0) target = $region17
    $region16: #{tpu_custom_call.1} parent=1 // pred_region
      _
    $region17: #{tpu_custom_call.1} parent=1 // pred_fallthru
      _
    // Predicated region
    $region18: #{tpu_custom_call.1} parent=1 // pred_check
      _
    $region19: #{tpu_custom_call.1} parent=1 // pred_check_branch
      %32 = sbr.rel (0) target = $region21
    $region20: #{tpu_custom_call.1} parent=1 // pred_region
      _
    $region21: #{tpu_custom_call.1} parent=1 // pred_fallthru
      _
    // Predicated region
    $region22: #{tpu_custom_call.1} parent=1 // pred_check
      _
    $region23: #{tpu_custom_call.1} parent=1 // pred_check_branch
      %34 = sbr.rel (0) target = $region25
    $region24: #{tpu_custom_call.1} parent=1 // pred_region
      _
    $region25: #{tpu_custom_call.1} parent=1 // pred_fallthru
      _
    // Predicated region
    $region26: #{tpu_custom_call.1} parent=1 // pred_check
      _
    $region27: #{tpu_custom_call.1} parent=1 // pred_check_branch
      %36 = sbr.rel (0) target = $region29
    $region28: #{tpu_custom_call.1} parent=1 // pred_region
      _
    $region29: #{tpu_custom_call.1} parent=1 // pred_fallthru
      _
    // Predicated region
    $region30: #{tpu_custom_call.1} parent=1 // pred_check
      _
    $region31: #{tpu_custom_call.1} parent=1 // pred_check_branch
      %38 = sbr.rel (0) target = $region33
    $region32: #{tpu_custom_call.1} parent=1 // pred_region
      _
    $region33: #{tpu_custom_call.1} parent=1 // pred_fallthru
      _
    // Predicated region
    $region34: #{tpu_custom_call.1} parent=1 // pred_check
      _
    $region35: #{tpu_custom_call.1} parent=1 // pred_check_branch
      %40 = sbr.rel (0) target = $region37
    $region36: #{tpu_custom_call.1} parent=1 // pred_region
      _
    $region37: #{tpu_custom_call.1} parent=1 // pred_fallthru
      _
    // Predicated region
    $region38: #{tpu_custom_call.1} parent=1 // pred_check
      _
    $region39: #{tpu_custom_call.1} parent=1 // pred_check_branch
      %42 = sbr.rel (0) target = $region41
    $region40: #{tpu_custom_call.1} parent=1 // pred_region
      _
    $region41: #{tpu_custom_call.1} parent=1 // pred_fallthru
      _
    // Predicated region
    $region42: #{tpu_custom_call.1} parent=1 // pred_check
      _
    $region43: #{tpu_custom_call.1} parent=1 // pred_check_branch
      %44 = sbr.rel (0) target = $region45
    $region44: #{tpu_custom_call.1} parent=1 // pred_region
      _
    $region45: #{tpu_custom_call.1} parent=1 // pred_fallthru
      _
    // Predicated region
    $region46: #{tpu_custom_call.1} parent=1 // pred_check
      _
    $region47: #{tpu_custom_call.1} parent=1 // pred_check_branch
      %46 = sbr.rel (0) target = $region49
    $region48: #{tpu_custom_call.1} parent=1 // pred_region
      _
    $region49: #{tpu_custom_call.1} parent=1 // pred_fallthru
      _
    // Predicated region
    $region50: #{tpu_custom_call.1} parent=1 // pred_check
      _
    $region51: #{tpu_custom_call.1} parent=1 // pred_check_branch
      %48 = sbr.rel (0) target = $region53
    $region52: #{tpu_custom_call.1} parent=1 // pred_region
      _
    $region53: #{tpu_custom_call.1} parent=1 // pred_fallthru
      _
    // Predicated region
    $region54: #{tpu_custom_call.1} parent=1 // pred_check
      _
    $region55: #{tpu_custom_call.1} parent=1 // pred_check_branch
      %50 = sbr.rel (0) target = $region57
    $region56: #{tpu_custom_call.1} parent=1 // pred_region
      _
    $region57: #{tpu_custom_call.1} parent=1 // pred_fallthru
      _
    // Predicated region
    $region58: #{tpu_custom_call.1} parent=1 // pred_check
      _
    $region59: #{tpu_custom_call.1} parent=1 // pred_check_branch
      %52 = sbr.rel (0) target = $region61
    $region60: #{tpu_custom_call.1} parent=1 // pred_region
      _
    $region61: #{tpu_custom_call.1} parent=1 // pred_fallthru
      _
    %v54 = vld [vmem:[%s0] sm:$0x3]
    %v55 = vld [vmem:[%s1] sm:$0xff]
    %v56 = vld [vmem:[%s1 + $0x8] sm:$0xff]
    %58 = vset.pattern.permute.xlu0 0
    %59 = vperm.xlu0 %58, %v55
    %v60 = vpop.permute.xlu0 %59
    %63 = vset.pattern.permute.xlu0 0
    %64 = vperm.xlu0 %63, %v56
    %v65 = vpop.permute.xlu0 %64
    %v67 = vlaneseq
    %v68 = vshrl.u32 %v67, 7
    %v69 = vsub.s32 0, %v68
    %v70 = vrot.slane %v54, %v69
    %v71 = vmul.f32 %v60, %v70
    %v72 = vmul.f32 %v65, %v70
    %73 = vset.pattern.permute.xlu0 1
    %74 = vperm.xlu0 %73, %v55
    %v75 = vpop.permute.xlu0 %74
    %77 = vset.pattern.permute.xlu0 1
    %78 = vperm.xlu0 %77, %v56
    %v79 = vpop.permute.xlu0 %78
    %v81 = vlaneseq
    %v82 = vshrl.u32 %v81, 7
    %v83 = vsub.s32 1, %v82
    %v84 = vrot.slane %v54, %v83
    %v85 = vmul.f32 %v75, %v84
    %v86 = vmul.f32 %v79, %v84
    %v87 = vadd.f32 %v71, %v85
    %v88 = vadd.f32 %v72, %v86
    %v89 = vld [vmem:[%s2] sm:$0xff]
    %v90 = vld [vmem:[%s2 + $0x8] sm:$0xff]
    %92 = vset.pattern.permute.xlu0 0
    %93 = vperm.xlu0 %92, %v89
    %v94 = vpop.permute.xlu0 %93
    %97 = vset.pattern.permute.xlu0 0
    %98 = vperm.xlu0 %97, %v90
    %v99 = vpop.permute.xlu0 %98
    %v101 = vadd.f32 %v87, %v94
    %v102 = vadd.f32 %v88, %v99
    %v103 = vmax.f32 %v101, 0.0
    %v104 = vmax.f32 %v102, 0.0
    %v105 = vld [vmem:[%s3] sm:$0xf]
    %v106 = vld [vmem:[%s3 + $0x4] sm:$0xf]
    %v107 = vld [vmem:[%s3 + $0x8] sm:$0xf]
    %v108 = vld [vmem:[%s3 + $0xc] sm:$0xf]
    %v109 = vpack.c.bf16 %v104, %v103
    %v110 = vld [vmem:[%s4] sm:$0xff]
    %v111 = vld [vmem:[%s4 + $0x8] sm:$0xff]
    %v112 = vld [vmem:[%s4 + $0x10] sm:$0xff]
    %v113 = vld [vmem:[%s4 + $0x18] sm:$0xff]
    %115 = vset.pattern.permute.xlu0 0
    %116 = vperm.xlu0 %115, %v110
    %v117 = vpop.permute.xlu0 %116
    %120 = vset.pattern.permute.xlu0 0
    %121 = vperm.xlu0 %120, %v111
    %v122 = vpop.permute.xlu0 %121
    %125 = vset.pattern.permute.xlu0 0
    %126 = vperm.xlu0 %125, %v112
    %v127 = vpop.permute.xlu0 %126
    %130 = vset.pattern.permute.xlu0 0
    %131 = vperm.xlu0 %130, %v113
    %v132 = vpop.permute.xlu0 %131
    %v138 = vunpack.c.l.b16 %v105
    %v139 = vunpack.c.l.b16 %v106
    %v140 = vunpack.c.l.b16 %v107
    %v141 = vunpack.c.l.b16 %v108
    %v142 = vpack.c.b16 %v139, %v138
    %v143 = vpack.c.b16 %v141, %v140
    %vm144 = vcmask 130048
    %v146 = vsel %vm144, %v142, 0
    %v149 = vsel %vm144, %v143, 0
    %151 = vmatprep.subr.bf16.mxu0 0
    %152 = vmatpush1.bf16.msra.mxu0 0
    %153 = vmatprep.subr.bf16.mxu0 0
    %154 = vmatpush1.bf16.msra.mxu0 0
    %155 = vmatprep.subr.bf16.mxu0 0
    %156 = vmatpush1.bf16.msra.mxu0 0
    %157 = vmatprep.subr.bf16.mxu0 0
    %158 = vmatpush1.bf16.msra.mxu0 0
    %159 = vmatprep.subr.bf16.mxu0 0
    %160 = vmatpush1.bf16.msra.mxu0 0
    %161 = vmatprep.subr.bf16.mxu0 0
    %162 = vmatpush1.bf16.msra.mxu0 0
    %163 = vmatprep.subr.bf16.mxu0 0
    %164 = vmatpush1.bf16.msra.mxu0 0
    %165 = vmatprep.subr.bf16.mxu0 0
    %166 = vmatpush1.bf16.msra.mxu0 %v109
    %167 = vmatprep.subr.bf16.mxu0 0
    %168 = vmatpush2.bf16.msra.mxu0 0
    %169 = vmatprep.subr.bf16.mxu0 0
    %170 = vmatpush2.bf16.msra.mxu0 0
    %171 = vmatprep.subr.bf16.mxu0 0
    %172 = vmatpush2.bf16.msra.mxu0 0
    %173 = vmatprep.subr.bf16.mxu0 0
    %174 = vmatpush2.bf16.msra.mxu0 0
    %175 = vmatprep.subr.bf16.mxu0 0
    %176 = vmatpush2.bf16.msra.mxu0 0
    %177 = vmatprep.subr.bf16.mxu0 0
    %178 = vmatpush2.bf16.msra.mxu0 0
    %179 = vmatprep.subr.bf16.mxu0 0
    %180 = vmatpush2.bf16.msra.mxu0 0
    %181 = vmatprep.subr.bf16.mxu0 0
    %182 = vmatpush2.bf16.msra.mxu0 0
    %183 = vmatprep.mubr.bf16.mxu0 0
    %184 = vmatmul.mubr.bf16.gmra.mxu0 %v146
    %v185 = vpop.f32.mrf.mxu0
    %v186 = vadd.f32 %v117, %v185
    %v187 = vpop.f32.mrf.mxu0
    %v188 = vpop.f32.mrf.mxu0
    %v189 = vadd.f32 %v122, %v188
    %v190 = vpop.f32.mrf.mxu0
    %191 = vmatprep.mubr.bf16.mxu0 0
    %192 = vmatmul.mubr.bf16.gmra.mxu0 %v149
    %v193 = vpop.f32.mrf.mxu0
    %v194 = vadd.f32 %v127, %v193
    %v195 = vpop.f32.mrf.mxu0
    %v196 = vpop.f32.mrf.mxu0
    %v197 = vadd.f32 %v132, %v196
    %v198 = vpop.f32.mrf.mxu0
    %199 = vdwg.mxu0
    %v200 = vmax.f32 %v186, 0.0
    %v201 = vmax.f32 %v189, 0.0
    %v202 = vmax.f32 %v194, 0.0
    %v203 = vmax.f32 %v197, 0.0
    %v204 = vld [vmem:[%s5] sm:$0x1]
    %v205 = vpack.c.bf16 %v201, %v200
    %v206 = vpack.c.bf16 %v203, %v202
    %v207 = vld [vmem:[%s6] sm:$0x3]
    %209 = vset.pattern.permute.xlu0 0
    %210 = vperm.xlu0 %209, %v207
    %v211 = vpop.permute.xlu0 %210
    %vm213 = vcmask 261120
    %v215 = vsel %vm213, %v204, 0
    %217 = vmatprep.subr.bf16.mxu0 0
    %218 = vmatpush1.bf16.msra.mxu0 0
    %219 = vmatprep.subr.bf16.mxu0 0
    %220 = vmatpush1.bf16.msra.mxu0 0
    %221 = vmatprep.subr.bf16.mxu0 0
    %222 = vmatpush1.bf16.msra.mxu0 0
    %223 = vmatprep.subr.bf16.mxu0 0
    %224 = vmatpush1.bf16.msra.mxu0 0
    %225 = vmatprep.subr.bf16.mxu0 0
    %226 = vmatpush1.bf16.msra.mxu0 0
    %227 = vmatprep.subr.bf16.mxu0 0
    %228 = vmatpush1.bf16.msra.mxu0 0
    %229 = vmatprep.subr.bf16.mxu0 0
    %230 = vmatpush1.bf16.msra.mxu0 %v206
    %231 = vmatprep.subr.bf16.mxu0 0
    %232 = vmatpush1.bf16.msra.mxu0 %v205
    %233 = vmatprep.subr.bf16.mxu0 0
    %234 = vmatpush2.bf16.msra.mxu0 0
    %235 = vmatprep.subr.bf16.mxu0 0
    %236 = vmatpush2.bf16.msra.mxu0 0
    %237 = vmatprep.subr.bf16.mxu0 0
    %238 = vmatpush2.bf16.msra.mxu0 0
    %239 = vmatprep.subr.bf16.mxu0 0
    %240 = vmatpush2.bf16.msra.mxu0 0
    %241 = vmatprep.subr.bf16.mxu0 0
    %242 = vmatpush2.bf16.msra.mxu0 0
    %243 = vmatprep.subr.bf16.mxu0 0
    %244 = vmatpush2.bf16.msra.mxu0 0
    %245 = vmatprep.subr.bf16.mxu0 0
    %246 = vmatpush2.bf16.msra.mxu0 0
    %247 = vmatprep.subr.bf16.mxu0 0
    %248 = vmatpush2.bf16.msra.mxu0 0
    %249 = vmatprep.mubr.bf16.mxu0 0
    %250 = vmatmul.mubr.bf16.gmra.mxu0 %v215
    %v251 = vpop.f32.mrf.mxu0
    %v252 = vadd.f32 %v211, %v251
    %v253 = vpop.f32.mrf.mxu0
    %v254 = vpop.f32.mrf.mxu0
    %v255 = vpop.f32.mrf.mxu0
    %256 = vdwg.mxu0
    %v257 = vmax.f32 %v252, 0.0
    %v258 = vpack.c.bf16 %v257, %v257
    %v259 = vld [vmem:[%s7] sm:$0xf]
    %v260 = vld [vmem:[%s7 + $0x4] sm:$0xf]
    %v261 = vld [vmem:[%s7 + $0x8] sm:$0xf]
    %v262 = vld [vmem:[%s7 + $0xc] sm:$0xf]
    %v263 = vld [vmem:[%s7 + $0x10] sm:$0xf]
    %v264 = vld [vmem:[%s7 + $0x14] sm:$0xf]
    %v265 = vld [vmem:[%s7 + $0x18] sm:$0xf]
    %v266 = vld [vmem:[%s7 + $0x1c] sm:$0xf]
    %v267 = vld [vmem:[%s7 + $0x20] sm:$0xf]
    %v268 = vld [vmem:[%s7 + $0x24] sm:$0xf]
    %v269 = vld [vmem:[%s7 + $0x28] sm:$0xf]
    %v270 = vld [vmem:[%s7 + $0x2c] sm:$0xf]
    %v271 = vld [vmem:[%s7 + $0x30] sm:$0xf]
    %v272 = vld [vmem:[%s7 + $0x34] sm:$0xf]
    %v273 = vld [vmem:[%s7 + $0x38] sm:$0xf]
    %v274 = vld [vmem:[%s7 + $0x3c] sm:$0xf]
    %v275 = vld [vmem:[%s7 + $0x40] sm:$0xf]
    %v276 = vld [vmem:[%s7 + $0x44] sm:$0xf]
    %v277 = vld [vmem:[%s7 + $0x48] sm:$0xf]
    %v278 = vld [vmem:[%s7 + $0x4c] sm:$0xf]
    %v279 = vld [vmem:[%s7 + $0x50] sm:$0xf]
    %v280 = vld [vmem:[%s7 + $0x54] sm:$0xf]
    %v281 = vld [vmem:[%s7 + $0x58] sm:$0xf]
    %v282 = vld [vmem:[%s7 + $0x5c] sm:$0xf]
    %v283 = vld [vmem:[%s7 + $0x60] sm:$0xf]
    %v284 = vld [vmem:[%s7 + $0x64] sm:$0xf]
    %v285 = vld [vmem:[%s7 + $0x68] sm:$0xf]
    %v286 = vld [vmem:[%s7 + $0x6c] sm:$0xf]
    %v287 = vld [vmem:[%s7 + $0x70] sm:$0xf]
    %v288 = vld [vmem:[%s7 + $0x74] sm:$0xf]
    %v289 = vld [vmem:[%s7 + $0x78] sm:$0xf]
    %v290 = vld [vmem:[%s7 + $0x7c] sm:$0xf]
    %v323 = vunpack.c.l.b16 %v259
    %v324 = vunpack.c.l.b16 %v260
    %v325 = vunpack.c.l.b16 %v261
    %v326 = vunpack.c.l.b16 %v262
    %v327 = vunpack.c.l.b16 %v263
    %v328 = vunpack.c.l.b16 %v264
    %v329 = vunpack.c.l.b16 %v265
    %v330 = vunpack.c.l.b16 %v266
    %v331 = vunpack.c.l.b16 %v267
    %v332 = vunpack.c.l.b16 %v268
    %v333 = vunpack.c.l.b16 %v269
    %v334 = vunpack.c.l.b16 %v270
    %v335 = vunpack.c.l.b16 %v271
    %v336 = vunpack.c.l.b16 %v272
    %v337 = vunpack.c.l.b16 %v273
    %v338 = vunpack.c.l.b16 %v274
    %v339 = vunpack.c.l.b16 %v275
    %v340 = vunpack.c.l.b16 %v276
    %v341 = vunpack.c.l.b16 %v277
    %v342 = vunpack.c.l.b16 %v278
    %v343 = vunpack.c.l.b16 %v279
    %v344 = vunpack.c.l.b16 %v280
    %v345 = vunpack.c.l.b16 %v281
    %v346 = vunpack.c.l.b16 %v282
    %v347 = vunpack.c.l.b16 %v283
    %v348 = vunpack.c.l.b16 %v284
    %v349 = vunpack.c.l.b16 %v285
    %v350 = vunpack.c.l.b16 %v286
    %v351 = vunpack.c.l.b16 %v287
    %v352 = vunpack.c.l.b16 %v288
    %v353 = vunpack.c.l.b16 %v289
    %v354 = vunpack.c.l.b16 %v290
    %v355 = vpack.c.b16 %v324, %v323
    %v356 = vpack.c.b16 %v326, %v325
    %v357 = vpack.c.b16 %v328, %v327
    %v358 = vpack.c.b16 %v330, %v329
    %v359 = vpack.c.b16 %v332, %v331
    %v360 = vpack.c.b16 %v334, %v333
    %v361 = vpack.c.b16 %v336, %v335
    %v362 = vpack.c.b16 %v338, %v337
    %v363 = vpack.c.b16 %v340, %v339
    %v364 = vpack.c.b16 %v342, %v341
    %v365 = vpack.c.b16 %v344, %v343
    %v366 = vpack.c.b16 %v346, %v345
    %v367 = vpack.c.b16 %v348, %v347
    %v368 = vpack.c.b16 %v350, %v349
    %v369 = vpack.c.b16 %v352, %v351
    %v370 = vpack.c.b16 %v354, %v353
    %vm371 = vcmask 15360
    %v373 = vsel %vm371, %v355, 0
    %v376 = vsel %vm371, %v356, 0
    %v379 = vsel %vm371, %v357, 0
    %v382 = vsel %vm371, %v358, 0
    %v385 = vsel %vm371, %v359, 0
    %v388 = vsel %vm371, %v360, 0
    %v391 = vsel %vm371, %v361, 0
    %v394 = vsel %vm371, %v362, 0
    %v397 = vsel %vm371, %v363, 0
    %v400 = vsel %vm371, %v364, 0
    %v403 = vsel %vm371, %v365, 0
    %v406 = vsel %vm371, %v366, 0
    %v409 = vsel %vm371, %v367, 0
    %v412 = vsel %vm371, %v368, 0
    %v415 = vsel %vm371, %v369, 0
    %v418 = vsel %vm371, %v370, 0
    %vm420 = vcmask 1040384
    %v422 = vsel %vm420, %v258, 0
    %424 = vmatprep.subr.bf16.mxu0 0
    %425 = vmatpush1.bf16.msra.mxu0 0
    %426 = vmatprep.subr.bf16.mxu0 0
    %427 = vmatpush1.bf16.msra.mxu0 0
    %428 = vmatprep.subr.bf16.mxu0 0
    %429 = vmatpush1.bf16.msra.mxu0 0
    %430 = vmatprep.subr.bf16.mxu0 0
    %431 = vmatpush1.bf16.msra.mxu0 0
    %432 = vmatprep.subr.bf16.mxu0 0
    %433 = vmatpush1.bf16.msra.mxu0 0
    %434 = vmatprep.subr.bf16.mxu0 0
    %435 = vmatpush1.bf16.msra.mxu0 0
    %436 = vmatprep.subr.bf16.mxu0 0
    %437 = vmatpush1.bf16.msra.mxu0 0
    %438 = vmatprep.subr.bf16.mxu0 0
    %439 = vmatpush1.bf16.msra.mxu0 %v422
    %440 = vmatprep.subr.bf16.mxu0 0
    %441 = vmatpush2.bf16.msra.mxu0 0
    %442 = vmatprep.subr.bf16.mxu0 0
    %443 = vmatpush2.bf16.msra.mxu0 0
    %444 = vmatprep.subr.bf16.mxu0 0
    %445 = vmatpush2.bf16.msra.mxu0 0
    %446 = vmatprep.subr.bf16.mxu0 0
    %447 = vmatpush2.bf16.msra.mxu0 0
    %448 = vmatprep.subr.bf16.mxu0 0
    %449 = vmatpush2.bf16.msra.mxu0 0
    %450 = vmatprep.subr.bf16.mxu0 0
    %451 = vmatpush2.bf16.msra.mxu0 0
    %452 = vmatprep.subr.bf16.mxu0 0
    %453 = vmatpush2.bf16.msra.mxu0 0
    %454 = vmatprep.subr.bf16.mxu0 0
    %455 = vmatpush2.bf16.msra.mxu0 0
    %456 = vmatprep.mubr.bf16.mxu0 0
    %457 = vmatmul.mubr.bf16.gmra.mxu0 %v373
    %v458 = vpop.f32.mrf.mxu0
    %v459 = vadd.f32 0.0, %v458
    %v460 = vpop.f32.mrf.mxu0
    %v461 = vpop.f32.mrf.mxu0
    %v462 = vadd.f32 0.0, %v461
    %v463 = vpop.f32.mrf.mxu0
    %464 = vmatprep.mubr.bf16.mxu0 0
    %465 = vmatmul.mubr.bf16.gmra.mxu0 %v376
    %v466 = vpop.f32.mrf.mxu0
    %v467 = vadd.f32 0.0, %v466
    %v468 = vpop.f32.mrf.mxu0
    %v469 = vpop.f32.mrf.mxu0
    %v470 = vadd.f32 0.0, %v469
    %v471 = vpop.f32.mrf.mxu0
    %472 = vmatprep.mubr.bf16.mxu0 0
    %473 = vmatmul.mubr.bf16.gmra.mxu0 %v379
    %v474 = vpop.f32.mrf.mxu0
    %v475 = vadd.f32 0.0, %v474
    %v476 = vpop.f32.mrf.mxu0
    %v477 = vpop.f32.mrf.mxu0
    %v478 = vadd.f32 0.0, %v477
    %v479 = vpop.f32.mrf.mxu0
    %480 = vmatprep.mubr.bf16.mxu0 0
    %481 = vmatmul.mubr.bf16.gmra.mxu0 %v382
    %v482 = vpop.f32.mrf.mxu0
    %v483 = vadd.f32 0.0, %v482
    %v484 = vpop.f32.mrf.mxu0
    %v485 = vpop.f32.mrf.mxu0
    %v486 = vadd.f32 0.0, %v485
    %v487 = vpop.f32.mrf.mxu0
    %488 = vmatprep.mubr.bf16.mxu0 0
    %489 = vmatmul.mubr.bf16.gmra.mxu0 %v385
    %v490 = vpop.f32.mrf.mxu0
    %v491 = vadd.f32 0.0, %v490
    %v492 = vpop.f32.mrf.mxu0
    %v493 = vpop.f32.mrf.mxu0
    %v494 = vadd.f32 0.0, %v493
    %v495 = vpop.f32.mrf.mxu0
    %496 = vmatprep.mubr.bf16.mxu0 0
    %497 = vmatmul.mubr.bf16.gmra.mxu0 %v388
    %v498 = vpop.f32.mrf.mxu0
    %v499 = vadd.f32 0.0, %v498
    %v500 = vpop.f32.mrf.mxu0
    %v501 = vpop.f32.mrf.mxu0
    %v502 = vadd.f32 0.0, %v501
    %v503 = vpop.f32.mrf.mxu0
    %504 = vmatprep.mubr.bf16.mxu0 0
    %505 = vmatmul.mubr.bf16.gmra.mxu0 %v391
    %v506 = vpop.f32.mrf.mxu0
    %v507 = vadd.f32 0.0, %v506
    %v508 = vpop.f32.mrf.mxu0
    %v509 = vpop.f32.mrf.mxu0
    %v510 = vadd.f32 0.0, %v509
    %v511 = vpop.f32.mrf.mxu0
    %512 = vmatprep.mubr.bf16.mxu0 0
    %513 = vmatmul.mubr.bf16.gmra.mxu0 %v394
    %v514 = vpop.f32.mrf.mxu0
    %v515 = vadd.f32 0.0, %v514
    %v516 = vpop.f32.mrf.mxu0
    %v517 = vpop.f32.mrf.mxu0
    %v518 = vadd.f32 0.0, %v517
    %v519 = vpop.f32.mrf.mxu0
    %520 = vmatprep.mubr.bf16.mxu0 0
    %521 = vmatmul.mubr.bf16.gmra.mxu0 %v397
    %v522 = vpop.f32.mrf.mxu0
    %v523 = vadd.f32 0.0, %v522
    %v524 = vpop.f32.mrf.mxu0
    %v525 = vpop.f32.mrf.mxu0
    %v526 = vadd.f32 0.0, %v525
    %v527 = vpop.f32.mrf.mxu0
    %528 = vmatprep.mubr.bf16.mxu0 0
    %529 = vmatmul.mubr.bf16.gmra.mxu0 %v400
    %v530 = vpop.f32.mrf.mxu0
    %v531 = vadd.f32 0.0, %v530
    %v532 = vpop.f32.mrf.mxu0
    %v533 = vpop.f32.mrf.mxu0
    %v534 = vadd.f32 0.0, %v533
    %v535 = vpop.f32.mrf.mxu0
    %536 = vmatprep.mubr.bf16.mxu0 0
    %537 = vmatmul.mubr.bf16.gmra.mxu0 %v403
    %v538 = vpop.f32.mrf.mxu0
    %v539 = vadd.f32 0.0, %v538
    %v540 = vpop.f32.mrf.mxu0
    %v541 = vpop.f32.mrf.mxu0
    %v542 = vadd.f32 0.0, %v541
    %v543 = vpop.f32.mrf.mxu0
    %544 = vmatprep.mubr.bf16.mxu0 0
    %545 = vmatmul.mubr.bf16.gmra.mxu0 %v406
    %v546 = vpop.f32.mrf.mxu0
    %v547 = vadd.f32 0.0, %v546
    %v548 = vpop.f32.mrf.mxu0
    %v549 = vpop.f32.mrf.mxu0
    %v550 = vadd.f32 0.0, %v549
    %v551 = vpop.f32.mrf.mxu0
    %552 = vmatprep.mubr.bf16.mxu0 0
    %553 = vmatmul.mubr.bf16.gmra.mxu0 %v409
    %v554 = vpop.f32.mrf.mxu0
    %v555 = vadd.f32 0.0, %v554
    %v556 = vpop.f32.mrf.mxu0
    %v557 = vpop.f32.mrf.mxu0
    %v558 = vadd.f32 0.0, %v557
    %v559 = vpop.f32.mrf.mxu0
    %560 = vmatprep.mubr.bf16.mxu0 0
    %561 = vmatmul.mubr.bf16.gmra.mxu0 %v412
    %v562 = vpop.f32.mrf.mxu0
    %v563 = vadd.f32 0.0, %v562
    %v564 = vpop.f32.mrf.mxu0
    %v565 = vpop.f32.mrf.mxu0
    %v566 = vadd.f32 0.0, %v565
    %v567 = vpop.f32.mrf.mxu0
    %568 = vmatprep.mubr.bf16.mxu0 0
    %569 = vmatmul.mubr.bf16.gmra.mxu0 %v415
    %v570 = vpop.f32.mrf.mxu0
    %v571 = vadd.f32 0.0, %v570
    %v572 = vpop.f32.mrf.mxu0
    %v573 = vpop.f32.mrf.mxu0
    %v574 = vadd.f32 0.0, %v573
    %v575 = vpop.f32.mrf.mxu0
    %576 = vmatprep.mubr.bf16.mxu0 0
    %577 = vmatmul.mubr.bf16.gmra.mxu0 %v418
    %v578 = vpop.f32.mrf.mxu0
    %v579 = vadd.f32 0.0, %v578
    %v580 = vpop.f32.mrf.mxu0
    %v581 = vpop.f32.mrf.mxu0
    %v582 = vadd.f32 0.0, %v581
    %v583 = vpop.f32.mrf.mxu0
    %584 = vdwg.mxu0
    %v585 = vpack.c.bf16 %v462, %v459
    %v586 = vpack.c.bf16 %v470, %v467
    %v587 = vpack.c.bf16 %v478, %v475
    %v588 = vpack.c.bf16 %v486, %v483
    %v589 = vpack.c.bf16 %v494, %v491
    %v590 = vpack.c.bf16 %v502, %v499
    %v591 = vpack.c.bf16 %v510, %v507
    %v592 = vpack.c.bf16 %v518, %v515
    %v593 = vpack.c.bf16 %v526, %v523
    %v594 = vpack.c.bf16 %v534, %v531
    %v595 = vpack.c.bf16 %v542, %v539
    %v596 = vpack.c.bf16 %v550, %v547
    %v597 = vpack.c.bf16 %v558, %v555
    %v598 = vpack.c.bf16 %v566, %v563
    %v599 = vpack.c.bf16 %v574, %v571
    %v600 = vpack.c.bf16 %v582, %v579
    %v601 = vld [vmem:[%s8] sm:$0xff]
    %v602 = vld [vmem:[%s8 + $0x8] sm:$0xff]
    %v603 = vld [vmem:[%s8 + $0x10] sm:$0xff]
    %v604 = vld [vmem:[%s8 + $0x18] sm:$0xff]
    %v605 = vld [vmem:[%s8 + $0x20] sm:$0xff]
    %v606 = vld [vmem:[%s8 + $0x28] sm:$0xff]
    %v607 = vld [vmem:[%s8 + $0x30] sm:$0xff]
    %v608 = vld [vmem:[%s8 + $0x38] sm:$0xff]
    %v609 = vld [vmem:[%s8 + $0x40] sm:$0xff]
    %v610 = vld [vmem:[%s8 + $0x48] sm:$0xff]
    %v611 = vld [vmem:[%s8 + $0x50] sm:$0xff]
    %v612 = vld [vmem:[%s8 + $0x58] sm:$0xff]
    %v613 = vld [vmem:[%s8 + $0x60] sm:$0xff]
    %v614 = vld [vmem:[%s8 + $0x68] sm:$0xff]
    %v615 = vld [vmem:[%s8 + $0x70] sm:$0xff]
    %v616 = vld [vmem:[%s8 + $0x78] sm:$0xff]
    %v617 = vld [vmem:[%s8 + $0x80] sm:$0xff]
    %v618 = vld [vmem:[%s8 + $0x88] sm:$0xff]
    %v619 = vld [vmem:[%s8 + $0x90] sm:$0xff]
    %v620 = vld [vmem:[%s8 + $0x98] sm:$0xff]
    %v621 = vld [vmem:[%s8 + $0xa0] sm:$0xff]
    %v622 = vld [vmem:[%s8 + $0xa8] sm:$0xff]
    %v623 = vld [vmem:[%s8 + $0xb0] sm:$0xff]
    %v624 = vld [vmem:[%s8 + $0xb8] sm:$0xff]
    %v625 = vld [vmem:[%s8 + $0xc0] sm:$0xff]
    %v626 = vld [vmem:[%s8 + $0xc8] sm:$0xff]
    %v627 = vld [vmem:[%s8 + $0xd0] sm:$0xff]
    %v628 = vld [vmem:[%s8 + $0xd8] sm:$0xff]
    %v629 = vld [vmem:[%s8 + $0xe0] sm:$0xff]
    %v630 = vld [vmem:[%s8 + $0xe8] sm:$0xff]
    %v631 = vld [vmem:[%s8 + $0xf0] sm:$0xff]
    %v632 = vld [vmem:[%s8 + $0xf8] sm:$0xff]
    %v633 = vpack.c.bf16 %v602, %v601
    %v634 = vpack.c.bf16 %v604, %v603
    %v635 = vpack.c.bf16 %v606, %v605
    %v636 = vpack.c.bf16 %v608, %v607
    %v637 = vpack.c.bf16 %v610, %v609
    %v638 = vpack.c.bf16 %v612, %v611
    %v639 = vpack.c.bf16 %v614, %v613
    %v640 = vpack.c.bf16 %v616, %v615
    %v641 = vpack.c.bf16 %v618, %v617
    %v642 = vpack.c.bf16 %v620, %v619
    %v643 = vpack.c.bf16 %v622, %v621
    %v644 = vpack.c.bf16 %v624, %v623
    %v645 = vpack.c.bf16 %v626, %v625
    %v646 = vpack.c.bf16 %v628, %v627
    %v647 = vpack.c.bf16 %v630, %v629
    %v648 = vpack.c.bf16 %v632, %v631
    %650 = vset.pattern.permute.xlu0 0
    %651 = vperm.xlu0 %650, %v633
    %v652 = vpop.permute.xlu0 %651
    %655 = vset.pattern.permute.xlu0 0
    %656 = vperm.xlu0 %655, %v634
    %v657 = vpop.permute.xlu0 %656
    %660 = vset.pattern.permute.xlu0 0
    %661 = vperm.xlu0 %660, %v635
    %v662 = vpop.permute.xlu0 %661
    %665 = vset.pattern.permute.xlu0 0
    %666 = vperm.xlu0 %665, %v636
    %v667 = vpop.permute.xlu0 %666
    %670 = vset.pattern.permute.xlu0 0
    %671 = vperm.xlu0 %670, %v637
    %v672 = vpop.permute.xlu0 %671
    %675 = vset.pattern.permute.xlu0 0
    %676 = vperm.xlu0 %675, %v638
    %v677 = vpop.permute.xlu0 %676
    %680 = vset.pattern.permute.xlu0 0
    %681 = vperm.xlu0 %680, %v639
    %v682 = vpop.permute.xlu0 %681
    %685 = vset.pattern.permute.xlu0 0
    %686 = vperm.xlu0 %685, %v640
    %v687 = vpop.permute.xlu0 %686
    %690 = vset.pattern.permute.xlu0 0
    %691 = vperm.xlu0 %690, %v641
    %v692 = vpop.permute.xlu0 %691
    %695 = vset.pattern.permute.xlu0 0
    %696 = vperm.xlu0 %695, %v642
    %v697 = vpop.permute.xlu0 %696
    %700 = vset.pattern.permute.xlu0 0
    %701 = vperm.xlu0 %700, %v643
    %v702 = vpop.permute.xlu0 %701
    %705 = vset.pattern.permute.xlu0 0
    %706 = vperm.xlu0 %705, %v644
    %v707 = vpop.permute.xlu0 %706
    %710 = vset.pattern.permute.xlu0 0
    %711 = vperm.xlu0 %710, %v645
    %v712 = vpop.permute.xlu0 %711
    %715 = vset.pattern.permute.xlu0 0
    %716 = vperm.xlu0 %715, %v646
    %v717 = vpop.permute.xlu0 %716
    %720 = vset.pattern.permute.xlu0 0
    %721 = vperm.xlu0 %720, %v647
    %v722 = vpop.permute.xlu0 %721
    %725 = vset.pattern.permute.xlu0 0
    %726 = vperm.xlu0 %725, %v648
    %v727 = vpop.permute.xlu0 %726
    %v729 = vadd.bf16 %v585, %v652
    %v730 = vadd.bf16 %v586, %v657
    %v731 = vadd.bf16 %v587, %v662
    %v732 = vadd.bf16 %v588, %v667
    %v733 = vadd.bf16 %v589, %v672
    %v734 = vadd.bf16 %v590, %v677
    %v735 = vadd.bf16 %v591, %v682
    %v736 = vadd.bf16 %v592, %v687
    %v737 = vadd.bf16 %v593, %v692
    %v738 = vadd.bf16 %v594, %v697
    %v739 = vadd.bf16 %v595, %v702
    %v740 = vadd.bf16 %v596, %v707
    %v741 = vadd.bf16 %v597, %v712
    %v742 = vadd.bf16 %v598, %v717
    %v743 = vadd.bf16 %v599, %v722
    %v744 = vadd.bf16 %v600, %v727
    %v745 = vmax.bf16 %v729, 0
    %v746 = vmax.bf16 %v730, 0
    %v747 = vmax.bf16 %v731, 0
    %v748 = vmax.bf16 %v732, 0
    %v749 = vmax.bf16 %v733, 0
    %v750 = vmax.bf16 %v734, 0
    %v751 = vmax.bf16 %v735, 0
    %v752 = vmax.bf16 %v736, 0
    %v753 = vmax.bf16 %v737, 0
    %v754 = vmax.bf16 %v738, 0
    %v755 = vmax.bf16 %v739, 0
    %v756 = vmax.bf16 %v740, 0
    %v757 = vmax.bf16 %v741, 0
    %v758 = vmax.bf16 %v742, 0
    %v759 = vmax.bf16 %v743, 0
    %v760 = vmax.bf16 %v744, 0
    %v761 = vld [vmem:[%s9] sm:$0xff]
    %v762 = vld [vmem:[%s9 + $0x8] sm:$0xff]
    %v763 = vld [vmem:[%s9 + $0x10] sm:$0xff]
    %v764 = vld [vmem:[%s9 + $0x18] sm:$0xff]
    %v765 = vld [vmem:[%s9 + $0x20] sm:$0xff]
    %v766 = vld [vmem:[%s9 + $0x28] sm:$0xff]
    %v767 = vld [vmem:[%s9 + $0x30] sm:$0xff]
    %v768 = vld [vmem:[%s9 + $0x38] sm:$0xff]
    %v769 = vld [vmem:[%s9 + $0x40] sm:$0xff]
    %v770 = vld [vmem:[%s9 + $0x48] sm:$0xff]
    %v771 = vld [vmem:[%s9 + $0x50] sm:$0xff]
    %v772 = vld [vmem:[%s9 + $0x58] sm:$0xff]
    %v773 = vld [vmem:[%s9 + $0x60] sm:$0xff]
    %v774 = vld [vmem:[%s9 + $0x68] sm:$0xff]
    %v775 = vld [vmem:[%s9 + $0x70] sm:$0xff]
    %v776 = vld [vmem:[%s9 + $0x78] sm:$0xff]
    %v793 = vunpack.c.l.b16 %v761
    %v794 = vunpack.c.h.b16 %v761
    %v795 = vunpack.c.l.b16 %v762
    %v796 = vunpack.c.h.b16 %v762
    %v797 = vunpack.c.l.b16 %v763
    %v798 = vunpack.c.h.b16 %v763
    %v799 = vunpack.c.l.b16 %v764
    %v800 = vunpack.c.h.b16 %v764
    %v801 = vunpack.c.l.b16 %v765
    %v802 = vunpack.c.h.b16 %v765
    %v803 = vunpack.c.l.b16 %v766
    %v804 = vunpack.c.h.b16 %v766
    %v805 = vunpack.c.l.b16 %v767
    %v806 = vunpack.c.h.b16 %v767
    %v807 = vunpack.c.l.b16 %v768
    %v808 = vunpack.c.h.b16 %v768
    %v809 = vunpack.c.l.b16 %v769
    %v810 = vunpack.c.h.b16 %v769
    %v811 = vunpack.c.l.b16 %v770
    %v812 = vunpack.c.h.b16 %v770
    %v813 = vunpack.c.l.b16 %v771
    %v814 = vunpack.c.h.b16 %v771
    %v815 = vunpack.c.l.b16 %v772
    %v816 = vunpack.c.h.b16 %v772
    %v817 = vunpack.c.l.b16 %v773
    %v818 = vunpack.c.h.b16 %v773
    %v819 = vunpack.c.l.b16 %v774
    %v820 = vunpack.c.h.b16 %v774
    %v821 = vunpack.c.l.b16 %v775
    %v822 = vunpack.c.h.b16 %v775
    %v823 = vunpack.c.l.b16 %v776
    %v824 = vunpack.c.h.b16 %v776
    %v825 = vpack.c.b16 %v795, %v793
    %v826 = vpack.c.b16 %v796, %v794
    %v827 = vpack.c.b16 %v799, %v797
    %v828 = vpack.c.b16 %v800, %v798
    %v829 = vpack.c.b16 %v803, %v801
    %v830 = vpack.c.b16 %v804, %v802
    %v831 = vpack.c.b16 %v807, %v805
    %v832 = vpack.c.b16 %v808, %v806
    %v833 = vpack.c.b16 %v811, %v809
    %v834 = vpack.c.b16 %v812, %v810
    %v835 = vpack.c.b16 %v815, %v813
    %v836 = vpack.c.b16 %v816, %v814
    %v837 = vpack.c.b16 %v819, %v817
    %v838 = vpack.c.b16 %v820, %v818
    %v839 = vpack.c.b16 %v823, %v821
    %v840 = vpack.c.b16 %v824, %v822
    %857 = vmatprep.subr.bf16.mxu0 0
    %858 = vmatpush1.bf16.msra.mxu0 %v752
    %859 = vmatprep.subr.bf16.mxu0 0
    %860 = vmatpush1.bf16.msra.mxu0 %v751
    %861 = vmatprep.subr.bf16.mxu0 0
    %862 = vmatpush1.bf16.msra.mxu0 %v750
    %863 = vmatprep.subr.bf16.mxu0 0
    %864 = vmatpush1.bf16.msra.mxu0 %v749
    %865 = vmatprep.subr.bf16.mxu0 0
    %866 = vmatpush1.bf16.msra.mxu0 %v748
    %867 = vmatprep.subr.bf16.mxu0 0
    %868 = vmatpush1.bf16.msra.mxu0 %v747
    %869 = vmatprep.subr.bf16.mxu0 0
    %870 = vmatpush1.bf16.msra.mxu0 %v746
    %871 = vmatprep.subr.bf16.mxu0 0
    %872 = vmatpush1.bf16.msra.mxu0 %v745
    %873 = vmatprep.subr.bf16.mxu0 0
    %874 = vmatpush2.bf16.msra.mxu0 %v760
    %875 = vmatprep.subr.bf16.mxu0 0
    %876 = vmatpush2.bf16.msra.mxu0 %v759
    %877 = vmatprep.subr.bf16.mxu0 0
    %878 = vmatpush2.bf16.msra.mxu0 %v758
    %879 = vmatprep.subr.bf16.mxu0 0
    %880 = vmatpush2.bf16.msra.mxu0 %v757
    %881 = vmatprep.subr.bf16.mxu0 0
    %882 = vmatpush2.bf16.msra.mxu0 %v756
    %883 = vmatprep.subr.bf16.mxu0 0
    %884 = vmatpush2.bf16.msra.mxu0 %v755
    %885 = vmatprep.subr.bf16.mxu0 0
    %886 = vmatpush2.bf16.msra.mxu0 %v754
    %887 = vmatprep.subr.bf16.mxu0 0
    %888 = vmatpush2.bf16.msra.mxu0 %v753
    %889 = vmatprep.mubr.bf16.mxu0 %v826
    %890 = vmatmul.mubr.bf16.gmra.mxu0 %v825
    %v891 = vpop.f32.mrf.mxu0
    %v892 = vadd.f32 0.0, %v891
    %v893 = vpop.f32.mrf.mxu0
    %v894 = vpop.f32.mrf.mxu0
    %v895 = vadd.f32 0.0, %v894
    %v896 = vpop.f32.mrf.mxu0
    %897 = vmatprep.mubr.bf16.mxu0 %v828
    %898 = vmatmul.mubr.bf16.gmra.mxu0 %v827
    %v899 = vpop.f32.mrf.mxu0
    %v900 = vadd.f32 0.0, %v899
    %v901 = vpop.f32.mrf.mxu0
    %v902 = vpop.f32.mrf.mxu0
    %v903 = vadd.f32 0.0, %v902
    %v904 = vpop.f32.mrf.mxu0
    %905 = vmatprep.mubr.bf16.mxu0 %v830
    %906 = vmatmul.mubr.bf16.gmra.mxu0 %v829
    %v907 = vpop.f32.mrf.mxu0
    %v908 = vadd.f32 0.0, %v907
    %v909 = vpop.f32.mrf.mxu0
    %v910 = vpop.f32.mrf.mxu0
    %v911 = vadd.f32 0.0, %v910
    %v912 = vpop.f32.mrf.mxu0
    %913 = vmatprep.mubr.bf16.mxu0 %v832
    %914 = vmatmul.mubr.bf16.gmra.mxu0 %v831
    %v915 = vpop.f32.mrf.mxu0
    %v916 = vadd.f32 0.0, %v915
    %v917 = vpop.f32.mrf.mxu0
    %v918 = vpop.f32.mrf.mxu0
    %v919 = vadd.f32 0.0, %v918
    %v920 = vpop.f32.mrf.mxu0
    %921 = vmatprep.mubr.bf16.mxu0 %v834
    %922 = vmatmul.mubr.bf16.gmra.mxu0 %v833
    %v923 = vpop.f32.mrf.mxu0
    %v924 = vadd.f32 0.0, %v923
    %v925 = vpop.f32.mrf.mxu0
    %v926 = vpop.f32.mrf.mxu0
    %v927 = vadd.f32 0.0, %v926
    %v928 = vpop.f32.mrf.mxu0
    %929 = vmatprep.mubr.bf16.mxu0 %v836
    %930 = vmatmul.mubr.bf16.gmra.mxu0 %v835
    %v931 = vpop.f32.mrf.mxu0
    %v932 = vadd.f32 0.0, %v931
    %v933 = vpop.f32.mrf.mxu0
    %v934 = vpop.f32.mrf.mxu0
    %v935 = vadd.f32 0.0, %v934
    %v936 = vpop.f32.mrf.mxu0
    %937 = vmatprep.mubr.bf16.mxu0 %v838
    %938 = vmatmul.mubr.bf16.gmra.mxu0 %v837
    %v939 = vpop.f32.mrf.mxu0
    %v940 = vadd.f32 0.0, %v939
    %v941 = vpop.f32.mrf.mxu0
    %v942 = vpop.f32.mrf.mxu0
    %v943 = vadd.f32 0.0, %v942
    %v944 = vpop.f32.mrf.mxu0
    %945 = vmatprep.mubr.bf16.mxu0 %v840
    %946 = vmatmul.mubr.bf16.gmra.mxu0 %v839
    %v947 = vpop.f32.mrf.mxu0
    %v948 = vadd.f32 0.0, %v947
    %v949 = vpop.f32.mrf.mxu0
    %v950 = vpop.f32.mrf.mxu0
    %v951 = vadd.f32 0.0, %v950
    %v952 = vpop.f32.mrf.mxu0
    %953 = vdwg.mxu0
    %v954 = vpack.c.bf16 %v895, %v892
    %v955 = vpack.c.bf16 %v903, %v900
    %v956 = vpack.c.bf16 %v911, %v908
    %v957 = vpack.c.bf16 %v919, %v916
    %v958 = vpack.c.bf16 %v927, %v924
    %v959 = vpack.c.bf16 %v935, %v932
    %v960 = vpack.c.bf16 %v943, %v940
    %v961 = vpack.c.bf16 %v951, %v948
    %v962 = vld [vmem:[%s10] sm:$0xff]
    %v963 = vld [vmem:[%s10 + $0x8] sm:$0xff]
    %v964 = vld [vmem:[%s10 + $0x10] sm:$0xff]
    %v965 = vld [vmem:[%s10 + $0x18] sm:$0xff]
    %v966 = vld [vmem:[%s10 + $0x20] sm:$0xff]
    %v967 = vld [vmem:[%s10 + $0x28] sm:$0xff]
    %v968 = vld [vmem:[%s10 + $0x30] sm:$0xff]
    %v969 = vld [vmem:[%s10 + $0x38] sm:$0xff]
    %v970 = vld [vmem:[%s10 + $0x40] sm:$0xff]
    %v971 = vld [vmem:[%s10 + $0x48] sm:$0xff]
    %v972 = vld [vmem:[%s10 + $0x50] sm:$0xff]
    %v973 = vld [vmem:[%s10 + $0x58] sm:$0xff]
    %v974 = vld [vmem:[%s10 + $0x60] sm:$0xff]
    %v975 = vld [vmem:[%s10 + $0x68] sm:$0xff]
    %v976 = vld [vmem:[%s10 + $0x70] sm:$0xff]
    %v977 = vld [vmem:[%s10 + $0x78] sm:$0xff]
    %v978 = vpack.c.bf16 %v963, %v962
    %v979 = vpack.c.bf16 %v965, %v964
    %v980 = vpack.c.bf16 %v967, %v966
    %v981 = vpack.c.bf16 %v969, %v968
    %v982 = vpack.c.bf16 %v971, %v970
    %v983 = vpack.c.bf16 %v973, %v972
    %v984 = vpack.c.bf16 %v975, %v974
    %v985 = vpack.c.bf16 %v977, %v976
    %987 = vset.pattern.permute.xlu0 0
    %988 = vperm.xlu0 %987, %v978
    %v989 = vpop.permute.xlu0 %988
    %992 = vset.pattern.permute.xlu0 0
    %993 = vperm.xlu0 %992, %v979
    %v994 = vpop.permute.xlu0 %993
    %997 = vset.pattern.permute.xlu0 0
    %998 = vperm.xlu0 %997, %v980
    %v999 = vpop.permute.xlu0 %998
    %1002 = vset.pattern.permute.xlu0 0
    %1003 = vperm.xlu0 %1002, %v981
    %v1004 = vpop.permute.xlu0 %1003
    %1007 = vset.pattern.permute.xlu0 0
    %1008 = vperm.xlu0 %1007, %v982
    %v1009 = vpop.permute.xlu0 %1008
    %1012 = vset.pattern.permute.xlu0 0
    %1013 = vperm.xlu0 %1012, %v983
    %v1014 = vpop.permute.xlu0 %1013
    %1017 = vset.pattern.permute.xlu0 0
    %1018 = vperm.xlu0 %1017, %v984
    %v1019 = vpop.permute.xlu0 %1018
    %1022 = vset.pattern.permute.xlu0 0
    %1023 = vperm.xlu0 %1022, %v985
    %v1024 = vpop.permute.xlu0 %1023
    %v1026 = vadd.bf16 %v954, %v989
    %v1027 = vadd.bf16 %v955, %v994
    %v1028 = vadd.bf16 %v956, %v999
    %v1029 = vadd.bf16 %v957, %v1004
    %v1030 = vadd.bf16 %v958, %v1009
    %v1031 = vadd.bf16 %v959, %v1014
    %v1032 = vadd.bf16 %v960, %v1019
    %v1033 = vadd.bf16 %v961, %v1024
    %v1034 = vmax.bf16 %v1026, 0
    %v1035 = vmax.bf16 %v1027, 0
    %v1036 = vmax.bf16 %v1028, 0
    %v1037 = vmax.bf16 %v1029, 0
    %v1038 = vmax.bf16 %v1030, 0
    %v1039 = vmax.bf16 %v1031, 0
    %v1040 = vmax.bf16 %v1032, 0
    %v1041 = vmax.bf16 %v1033, 0
    %v1042 = vld [vmem:[%s11] sm:$0xf]
    %v1043 = vld [vmem:[%s11 + $0x4] sm:$0xf]
    %v1044 = vld [vmem:[%s11 + $0x8] sm:$0xf]
    %v1045 = vld [vmem:[%s11 + $0xc] sm:$0xf]
    %v1046 = vld [vmem:[%s11 + $0x10] sm:$0xf]
    %v1047 = vld [vmem:[%s11 + $0x14] sm:$0xf]
    %v1048 = vld [vmem:[%s11 + $0x18] sm:$0xf]
    %v1049 = vld [vmem:[%s11 + $0x1c] sm:$0xf]
    %v1058 = vunpack.c.l.b16 %v1042
    %v1059 = vunpack.c.l.b16 %v1043
    %v1060 = vunpack.c.l.b16 %v1044
    %v1061 = vunpack.c.l.b16 %v1045
    %v1062 = vunpack.c.l.b16 %v1046
    %v1063 = vunpack.c.l.b16 %v1047
    %v1064 = vunpack.c.l.b16 %v1048
    %v1065 = vunpack.c.l.b16 %v1049
    %v1066 = vpack.c.b16 %v1059, %v1058
    %v1067 = vpack.c.b16 %v1061, %v1060
    %v1068 = vpack.c.b16 %v1063, %v1062
    %v1069 = vpack.c.b16 %v1065, %v1064
    %1074 = vmatprep.subr.bf16.mxu0 0
    %1075 = vmatpush1.bf16.msra.mxu0 %v1041
    %1076 = vmatprep.subr.bf16.mxu0 0
    %1077 = vmatpush1.bf16.msra.mxu0 %v1040
    %1078 = vmatprep.subr.bf16.mxu0 0
    %1079 = vmatpush1.bf16.msra.mxu0 %v1039
    %1080 = vmatprep.subr.bf16.mxu0 0
    %1081 = vmatpush1.bf16.msra.mxu0 %v1038
    %1082 = vmatprep.subr.bf16.mxu0 0
    %1083 = vmatpush1.bf16.msra.mxu0 %v1037
    %1084 = vmatprep.subr.bf16.mxu0 0
    %1085 = vmatpush1.bf16.msra.mxu0 %v1036
    %1086 = vmatprep.subr.bf16.mxu0 0
    %1087 = vmatpush1.bf16.msra.mxu0 %v1035
    %1088 = vmatprep.subr.bf16.mxu0 0
    %1089 = vmatpush1.bf16.msra.mxu0 %v1034
    %1090 = vmatprep.subr.bf16.mxu0 0
    %1091 = vmatpush2.bf16.msra.mxu0 0
    %1092 = vmatprep.subr.bf16.mxu0 0
    %1093 = vmatpush2.bf16.msra.mxu0 0
    %1094 = vmatprep.subr.bf16.mxu0 0
    %1095 = vmatpush2.bf16.msra.mxu0 0
    %1096 = vmatprep.subr.bf16.mxu0 0
    %1097 = vmatpush2.bf16.msra.mxu0 0
    %1098 = vmatprep.subr.bf16.mxu0 0
    %1099 = vmatpush2.bf16.msra.mxu0 0
    %1100 = vmatprep.subr.bf16.mxu0 0
    %1101 = vmatpush2.bf16.msra.mxu0 0
    %1102 = vmatprep.subr.bf16.mxu0 0
    %1103 = vmatpush2.bf16.msra.mxu0 0
    %1104 = vmatprep.subr.bf16.mxu0 0
    %1105 = vmatpush2.bf16.msra.mxu0 0
    %1106 = vmatprep.mubr.bf16.mxu0 0
    %1107 = vmatmul.mubr.bf16.gmra.mxu0 %v1066
    %v1108 = vpop.f32.mrf.mxu0
    %v1109 = vadd.f32 0.0, %v1108
    %v1110 = vpop.f32.mrf.mxu0
    %v1111 = vpop.f32.mrf.mxu0
    %v1112 = vadd.f32 0.0, %v1111
    %v1113 = vpop.f32.mrf.mxu0
    %1114 = vmatprep.mubr.bf16.mxu0 0
    %1115 = vmatmul.mubr.bf16.gmra.mxu0 %v1067
    %v1116 = vpop.f32.mrf.mxu0
    %v1117 = vadd.f32 0.0, %v1116
    %v1118 = vpop.f32.mrf.mxu0
    %v1119 = vpop.f32.mrf.mxu0
    %v1120 = vadd.f32 0.0, %v1119
    %v1121 = vpop.f32.mrf.mxu0
    %1122 = vmatprep.mubr.bf16.mxu0 0
    %1123 = vmatmul.mubr.bf16.gmra.mxu0 %v1068
    %v1124 = vpop.f32.mrf.mxu0
    %v1125 = vadd.f32 0.0, %v1124
    %v1126 = vpop.f32.mrf.mxu0
    %v1127 = vpop.f32.mrf.mxu0
    %v1128 = vadd.f32 0.0, %v1127
    %v1129 = vpop.f32.mrf.mxu0
    %1130 = vmatprep.mubr.bf16.mxu0 0
    %1131 = vmatmul.mubr.bf16.gmra.mxu0 %v1069
    %v1132 = vpop.f32.mrf.mxu0
    %v1133 = vadd.f32 0.0, %v1132
    %v1134 = vpop.f32.mrf.mxu0
    %v1135 = vpop.f32.mrf.mxu0
    %v1136 = vadd.f32 0.0, %v1135
    %v1137 = vpop.f32.mrf.mxu0
    %1138 = vdwg.mxu0
    %v1139 = vpack.c.bf16 %v1112, %v1109
    %v1140 = vpack.c.bf16 %v1120, %v1117
    %v1141 = vpack.c.bf16 %v1128, %v1125
    %v1142 = vpack.c.bf16 %v1136, %v1133
    %v1143 = vld [vmem:[%s12] sm:$0xff]
    %v1144 = vld [vmem:[%s12 + $0x8] sm:$0xff]
    %v1145 = vld [vmem:[%s12 + $0x10] sm:$0xff]
    %v1146 = vld [vmem:[%s12 + $0x18] sm:$0xff]
    %v1147 = vld [vmem:[%s12 + $0x20] sm:$0xff]
    %v1148 = vld [vmem:[%s12 + $0x28] sm:$0xff]
    %v1149 = vld [vmem:[%s12 + $0x30] sm:$0xff]
    %v1150 = vld [vmem:[%s12 + $0x38] sm:$0xff]
    %v1151 = vpack.c.bf16 %v1144, %v1143
    %v1152 = vpack.c.bf16 %v1146, %v1145
    %v1153 = vpack.c.bf16 %v1148, %v1147
    %v1154 = vpack.c.bf16 %v1150, %v1149
    %1156 = vset.pattern.permute.xlu0 0
    %1157 = vperm.xlu0 %1156, %v1151
    %v1158 = vpop.permute.xlu0 %1157
    %1161 = vset.pattern.permute.xlu0 0
    %1162 = vperm.xlu0 %1161, %v1152
    %v1163 = vpop.permute.xlu0 %1162
    %1166 = vset.pattern.permute.xlu0 0
    %1167 = vperm.xlu0 %1166, %v1153
    %v1168 = vpop.permute.xlu0 %1167
    %1171 = vset.pattern.permute.xlu0 0
    %1172 = vperm.xlu0 %1171, %v1154
    %v1173 = vpop.permute.xlu0 %1172
    %v1175 = vadd.bf16 %v1139, %v1158
    %v1176 = vadd.bf16 %v1140, %v1163
    %v1177 = vadd.bf16 %v1141, %v1168
    %v1178 = vadd.bf16 %v1142, %v1173
    %v1179 = vmax.bf16 %v1175, 0
    %v1180 = vmax.bf16 %v1176, 0
    %v1181 = vmax.bf16 %v1177, 0
    %v1182 = vmax.bf16 %v1178, 0
    %v1183 = vld [vmem:[%s13] sm:$0x1]
    %v1184 = vld [vmem:[#allocation2] sm:$0x1]
    %1186 = vset.pattern.permute.xlu0 0
    %1187 = vperm.xlu0 %1186, %v1184
    %v1188 = vpop.permute.xlu0 %1187
    %v1190 = vlaneseq
    %v1191 = vshrl.u32 %v1190, 7
    %v1192 = vsub.s32 0, %v1191
    %v1193 = vrot.slane %v1188, %v1192
    %vm1194 = vcmask 523264
    %v1196 = vsel %vm1194, %v1183, 0
    %1198 = vmatprep.subr.bf16.mxu0 0
    %1199 = vmatpush1.bf16.msra.mxu0 0
    %1200 = vmatprep.subr.bf16.mxu0 0
    %1201 = vmatpush1.bf16.msra.mxu0 0
    %1202 = vmatprep.subr.bf16.mxu0 0
    %1203 = vmatpush1.bf16.msra.mxu0 0
    %1204 = vmatprep.subr.bf16.mxu0 0
    %1205 = vmatpush1.bf16.msra.mxu0 0
    %1206 = vmatprep.subr.bf16.mxu0 0
    %1207 = vmatpush1.bf16.msra.mxu0 %v1182
    %1208 = vmatprep.subr.bf16.mxu0 0
    %1209 = vmatpush1.bf16.msra.mxu0 %v1181
    %1210 = vmatprep.subr.bf16.mxu0 0
    %1211 = vmatpush1.bf16.msra.mxu0 %v1180
    %1212 = vmatprep.subr.bf16.mxu0 0
    %1213 = vmatpush1.bf16.msra.mxu0 %v1179
    %1214 = vmatprep.subr.bf16.mxu0 0
    %1215 = vmatpush2.bf16.msra.mxu0 0
    %1216 = vmatprep.subr.bf16.mxu0 0
    %1217 = vmatpush2.bf16.msra.mxu0 0
    %1218 = vmatprep.subr.bf16.mxu0 0
    %1219 = vmatpush2.bf16.msra.mxu0 0
    %1220 = vmatprep.subr.bf16.mxu0 0
    %1221 = vmatpush2.bf16.msra.mxu0 0
    %1222 = vmatprep.subr.bf16.mxu0 0
    %1223 = vmatpush2.bf16.msra.mxu0 0
    %1224 = vmatprep.subr.bf16.mxu0 0
    %1225 = vmatpush2.bf16.msra.mxu0 0
    %1226 = vmatprep.subr.bf16.mxu0 0
    %1227 = vmatpush2.bf16.msra.mxu0 0
    %1228 = vmatprep.subr.bf16.mxu0 0
    %1229 = vmatpush2.bf16.msra.mxu0 0
    %1230 = vmatprep.mubr.bf16.mxu0 0
    %1231 = vmatmul.mubr.bf16.gmra.mxu0 %v1196
    %v1232 = vpop.f32.mrf.mxu0
    %v1233 = vadd.f32 %v1193, %v1232
    %v1234 = vpop.f32.mrf.mxu0
    %v1235 = vpop.f32.mrf.mxu0
    %v1236 = vpop.f32.mrf.mxu0
    %1237 = vdwg.mxu0
    %v1238 = vand.u32 2147483647, %v1233
    %v1239 = vsub.f32 0.0, %v1238
    %v1240 = vmul.f32 %v1239, 1.442695
    %v1241 = vpow.pop %v1240
    %vm1242 = vcmp.ge.f32.partialorder %v1233, 0.0
    %v1243 = vsel %vm1242, 1.0, %v1241
    %v1244 = vadd.f32 %v1241, 1.0
    %v1245 = vrcp.pop %v1244
    %v1246 = vmul.f32 %v1243, %v1245
    %vm1247 = vcmask 57344
    %1248 = vst.msk [vmem:[#allocation3] sm:$0x1] %vm1247, %v1246
    // Predicated region
    $region62: #{tpu_custom_call.1} parent=1 // pred_check
      _
    $region63: #{tpu_custom_call.1} parent=1 // pred_check_branch
      %1250 = sbr.rel (0) target = $region65
    $region64: #{tpu_custom_call.1} parent=1 // pred_region
      %s1252 = ssub.s32 16, 16
      %1253 = vsyncadd [#allocation4], %s1252
      %s1255 = sshll.u32 [#allocation3], 4
      %s1256 = int_to_ptr.vmem [resolvable:$true] %s1255
      %1258 = dma.vmem_to_hbm [thread:$0]  %s1256, 16, %s15, [#allocation4]
    $region65: #{tpu_custom_call.1} parent=1 // pred_fallthru
      _
    // Predicated region
    $region66: #{tpu_custom_call.1} parent=1 // pred_check
      _
    $region67: #{tpu_custom_call.1} parent=1 // pred_check_branch
      %1260 = sbr.rel (0) target = $region69
    $region68: #{tpu_custom_call.1} parent=1 // pred_region
      %1261 = dma.done [#allocation4], 16
    $region69: #{tpu_custom_call.1} parent=1 // pred_fallthru
      _
    %1262 = vsyncpa [#allocation4], 1

</llo_original>
